<compile_context>
chip_gen: v5e
topology: v5e:2x2
jax: 0.10.0
libtpu: 0.0.40
codegen_flags: <defaults>
</compile_context>

<pallas_src>
import functools

import jax
import jax.numpy as jnp
from jax.experimental import pallas as pl
from jax.experimental.pallas import tpu as pltpu


# ----------------------------- kernels --------------------------------------


def _rope_kernel_matmul(t_ref, cos_ref, sin_ref, swap_ref, o_ref, *, compute_dtype):
    # t_ref: (Bblk, TS, D); cos/sin: (1, TS, D) (sin has rotate_half sign baked in);
    # swap_ref: (D, D) unsigned pair-swap permutation matrix.
    t = t_ref[...].astype(compute_dtype)
    bblk, ts, d = t.shape
    # Unsigned adjacent pair swap on the MXU (small D only; MXU slot otherwise
    # idle in this HBM-bound streaming kernel).  swap entries are exactly 0/1,
    # so requesting the narrow result dtype is exact.
    rot = jnp.dot(
        t.reshape(bblk * ts, d), swap_ref[...], preferred_element_type=compute_dtype
    ).reshape(bblk, ts, d)
    o_ref[...] = (t * cos_ref[...] + rot * sin_ref[...]).astype(o_ref.dtype)


def _rope_kernel_roll(t_ref, cos_ref, sin_ref, o_ref, *, compute_dtype, nxt_shift):
    # Large, lane-aligned D: unsigned pair swap via two lane rotations (XLU) and
    # a parity select (VPU).  nxt_shift is chosen in the wrapper so that
    #   pltpu.roll(t, nxt_shift, axis)[..., j] == t[..., (j + 1) % d].
    t = t_ref[...].astype(compute_dtype)
    d = t.shape[-1]
    axis = t.ndim - 1
    nxt = pltpu.roll(t, shift=nxt_shift, axis=axis)      # t[..., j+1 mod d]
    prv = pltpu.roll(t, shift=d - nxt_shift, axis=axis)  # t[..., j-1 mod d]
    lane = jax.lax.broadcasted_iota(jnp.int32, t.shape, axis)
    swap = jnp.where(lane % 2 == 0, nxt, prv)            # unsigned pair swap
    o_ref[...] = (t * cos_ref[...] + swap * sin_ref[...]).astype(o_ref.dtype)


# ------------------------- configuration helpers ----------------------------


def _tpu_generation():
    try:
        kind = jax.devices()[0].device_kind.lower()
    except Exception:
        return "unknown"
    if "v7" in kind:
        return "v7x"
    if "v6" in kind:
        return "v6e"
    if "v5" in kind:
        return "v5"  # v5e / v5p: no bf16 VPU -> compute in f32 in-register
    return "unknown"


@functools.lru_cache(maxsize=None)
def _roll_is_jnp_like():
    """True iff pltpu.roll(x, 1, axis)[..., j] == x[..., j-1] (jnp.roll semantics)."""
    def probe(o_ref):
        x = jax.lax.broadcasted_iota(jnp.int32, (8, 128), 1)
        o_ref[...] = pltpu.roll(x, shift=1, axis=1)

    try:
        out = pl.pallas_call(
            probe, out_shape=jax.ShapeDtypeStruct((8, 128), jnp.int32)
        )()
        return bool(int(out[0, 1]) == 0)
    except Exception:
        return True  # assume jnp.roll-compatible semantics


def _choose_blocks(B, S, D, in_itemsize, use_roll, gen):
    # Per-block budget on the streamed input tile.  Larger tiles amortize the
    # ~0.35us/step overhead and approach the HBM roofline; v7x gets a smaller
    # budget because its physical VMEM is 64 MiB (vs 128 MiB on v5e/v6e).
    budget = (2 << 20) if gen == "v7x" else (4 << 20)
    rows = max(16, budget // max(1, D * in_itemsize))
    if S <= rows:
        ts = S
        # Fold whole batch rows into the block (bigger DMAs, fewer grid steps).
        # The matmul path flattens (Bblk, S, D) -> (Bblk*S, D); that merge is
        # only layout-trivial when S is a multiple of the sublane tile, so
        # require S % 16 == 0 there (covers f32 and packed bf16).
        if use_roll or S % 16 == 0:
            bblk = max(1, min(B, rows // max(1, S)))
        else:
            bblk = 1
    else:
        ts = max(16, (rows // 16) * 16)   # multiple of 16, no artificial cap
        bblk = 1
    return bblk, ts


# ------------------------------ entry points --------------------------------


def _rope_core(t, theta):
    B, S, D = t.shape
    assert D % 2 == 0, "rotary feature dim must be even"

    gen = _tpu_generation()
    # bf16 elementwise compute only where the VPU has a bf16 path (v6e / v7x);
    # elsewhere keep HBM traffic in bf16 but compute in f32 in-register.
    if t.dtype == jnp.bfloat16 and gen in ("v6e", "v7x"):
        compute_dtype = jnp.bfloat16
    else:
        compute_dtype = jnp.float32

    # rotate_half strategy: roll+select for large lane-aligned D, MXU pair-swap
    # matmul for small D (robust for any even D, matrix <= 256x256).
    use_roll = (D % 128 == 0) and (D >= 256)

    # ---- tables (built once in f32; rotate_half sign baked into sin) ----
    inv_freq = 1.0 / (theta ** (jnp.arange(0, D, 2, dtype=jnp.float32) / D))   # (D//2,)
    freqs = jnp.arange(S, dtype=jnp.float32)[:, None] * inv_freq[None, :]      # (S, D//2)
    freqs = jnp.repeat(freqs, 2, axis=-1)                                      # (S, D)
    sign = jnp.where(jnp.arange(D) % 2 == 0, -1.0, 1.0)[None, :]               # (1, D)
    cos = jnp.cos(freqs).astype(compute_dtype)[None]                           # (1, S, D)
    sin = (jnp.sin(freqs) * sign).astype(compute_dtype)[None]                  # (1, S, D)

    in_itemsize = jnp.dtype(t.dtype).itemsize
    Bblk, TS = _choose_blocks(B, S, D, in_itemsize, use_roll, gen)
    # seq tiles outer, batch inner -> cos/sin blocks stay VMEM-resident across
    # the whole batch (fetched once per sequence tile).
    grid = (pl.cdiv(S, TS), pl.cdiv(B, Bblk))

    t_spec = pl.BlockSpec((Bblk, TS, D), lambda s, b: (b, s, 0))
    tbl_spec = pl.BlockSpec((1, TS, D), lambda s, b: (0, s, 0))
    in_specs = [t_spec, tbl_spec, tbl_spec]
    operands = [t, cos, sin]

    if use_roll:
        nxt_shift = (D - 1) if _roll_is_jnp_like() else 1
        kernel = functools.partial(
            _rope_kernel_roll, compute_dtype=compute_dtype, nxt_shift=nxt_shift)
    else:
        # Unsigned pair-swap permutation: (t @ M)[:, j] = t[:, partner(j)].
        idx = jnp.arange(D)
        partner = jnp.where(idx % 2 == 0, idx + 1, idx - 1)
        swap = (idx[:, None] == partner[None, :]).astype(compute_dtype)        # (D, D)
        in_specs.append(pl.BlockSpec((D, D), lambda s, b: (0, 0)))
        operands.append(swap)
        kernel = functools.partial(_rope_kernel_matmul, compute_dtype=compute_dtype)

    vmem_limit = (48 << 20) if gen == "v7x" else (64 << 20)

    return pl.pallas_call(
        kernel,
        out_shape=jax.ShapeDtypeStruct((B, S, D), t.dtype),
        grid_spec=pltpu.PrefetchScalarGridSpec(
            num_scalar_prefetch=0,
            grid=grid,
            in_specs=in_specs,
            out_specs=pl.BlockSpec((Bblk, TS, D), lambda s, b: (b, s, 0)),
        ),
        compiler_params=pltpu.CompilerParams(
            dimension_semantics=("parallel", "parallel"),
            vmem_limit_bytes=vmem_limit,
        ),
    )(*operands)


def rotary_position_embedding(t, dim=None, theta=10000.0):
    """Equivalent of RotaryPositionEmbedding(dim).rotate_queries_or_keys(t), t: (B, S, D)."""
    B, S, D = t.shape
    if dim is None:
        dim = D
    assert dim % 2 == 0 and dim <= D
    if dim == D:
        return _rope_core(t, theta)
    # start_index = 0: rotate the first `dim` features, pass the remainder through.
    rotated = _rope_core(t[..., :dim], theta)
    return jnp.concatenate([rotated, t[..., dim:]], axis=-1)


def _reference(t, dim=None, theta=10000.0):
    """Pure-JAX reference mirroring the PyTorch module exactly."""
    B, S, D = t.shape
    if dim is None:
        dim = D
    inv_freq = 1.0 / (theta ** (jnp.arange(0, dim, 2, dtype=jnp.float32) / dim))
    freqs = jnp.arange(S, dtype=jnp.float32)[:, None] * inv_freq[None, :]
    freqs = jnp.repeat(freqs, 2, axis=-1)  # (S, dim)

    def rotate_half(x):
        x = x.reshape(*x.shape[:-1], x.shape[-1] // 2, 2)
        x1, x2 = x[..., 0], x[..., 1]
        x = jnp.stack((-x2, x1), axis=-1)
        return x.reshape(*x.shape[:-2], -1)

    tr = t[..., :dim]
    rot = tr * jnp.cos(freqs) + rotate_half(tr) * jnp.sin(freqs)
    return jnp.concatenate([rot, t[..., dim:]], axis=-1).astype(t.dtype)


if __name__ == "__main__":
    keys = jax.random.split(jax.random.PRNGKey(0), 5)

    def check(t, dim, tol):
        out = jax.block_until_ready(rotary_position_embedding(t, dim=dim))
        ref = _reference(t, dim=dim)
        assert out.shape == t.shape and out.dtype == t.dtype
        ok = jnp.allclose(out.astype(jnp.float32), ref.astype(jnp.float32),
                          atol=tol, rtol=tol)
        assert ok, f"mismatch vs reference for shape {t.shape} dtype {t.dtype}"

    # MXU pair-swap path (small D), batch not folded (S % 16 != 0)
    check(jax.random.normal(keys[0], (2, 8, 32), jnp.float32), 32, 1e-5)
    # MXU path, B = 1
    check(jax.random.normal(keys[1], (1, 16, 64), jnp.float32), 64, 1e-5)
    # MXU path with batch folding (Bblk > 1 -> in-kernel (Bblk*TS, D) flatten)
    check(jax.random.normal(keys[2], (4, 32, 64), jnp.float32), 64, 1e-5)
    # roll + parity-select path (lane-aligned D >= 256)
    check(jax.random.normal(keys[3], (2, 16, 256), jnp.float32), 256, 1e-5)
    # bf16 input (bf16 compute on v6e/v7x, f32 in-register compute elsewhere)
    check(jax.random.normal(keys[4], (2, 16, 64), jnp.float32).astype(jnp.bfloat16),
          64, 5e-2)
    # partial rotation (dim < D): rotate first 32 features, pass through the rest
    check(jax.random.normal(keys[0], (2, 8, 48), jnp.float32), 32, 1e-5)

    print("KERNEL_OK")
</pallas_src>

<mosaic_0001>
module attributes {stable_mosaic.version = 11 : i64} {
  func.func @_rope_kernel_matmul(%arg0: i32, %arg1: i32, %arg2: memref<1x8x32xf32, #tpu.memory_space<vmem>>, %arg3: memref<1x8x32xf32, #tpu.memory_space<vmem>>, %arg4: memref<1x8x32xf32, #tpu.memory_space<vmem>>, %arg5: memref<32x32xf32, #tpu.memory_space<vmem>>, %arg6: memref<1x8x32xf32, #tpu.memory_space<vmem>>) attributes {dimension_semantics = [#tpu.dimension_semantics<parallel>, #tpu.dimension_semantics<parallel>], iteration_bounds = array<i64: 1, 2>, scalar_prefetch = 0 : i64, scratch_operands = 0 : i64, tpu.core_type = #tpu.core_type<tc>, window_params = [{transform_indices = @transform_0, window_bounds = array<i64: 1, 8, 32>}, {transform_indices = @transform_1, window_bounds = array<i64: 1, 8, 32>}, {transform_indices = @transform_2, window_bounds = array<i64: 1, 8, 32>}, {pipeline_mode = #tpu.pipeline_mode<synchronous>, transform_indices = @transform_3, window_bounds = array<i64: 32, 32>}, {transform_indices = @transform_4, window_bounds = array<i64: 1, 8, 32>}]} {
    %c0 = arith.constant 0 : index
    %c0_0 = arith.constant 0 : index
    %c0_1 = arith.constant 0 : index
    %0 = vector.load %arg2[%c0, %c0_0, %c0_1] : memref<1x8x32xf32, #tpu.memory_space<vmem>>, vector<1x8x32xf32>
    %1 = vector.shape_cast %0 : vector<1x8x32xf32> to vector<8x32xf32>
    %c0_2 = arith.constant 0 : index
    %c0_3 = arith.constant 0 : index
    %2 = vector.load %arg5[%c0_2, %c0_3] : memref<32x32xf32, #tpu.memory_space<vmem>>, vector<32x32xf32>
    %cst = arith.constant dense<0.000000e+00> : vector<8x32xf32>
    %3 = tpu.matmul %1, %2, %cst {dimension_numbers = #tpu.dot_dimension_numbers<[1], [0], [0], [1], [0, 0, 1, 1], [], []>} : vector<8x32xf32>, vector<32x32xf32>, vector<8x32xf32> -> vector<8x32xf32>
    %4 = vector.shape_cast %3 : vector<8x32xf32> to vector<1x8x32xf32>
    %c0_4 = arith.constant 0 : index
    %c0_5 = arith.constant 0 : index
    %c0_6 = arith.constant 0 : index
    %5 = vector.load %arg3[%c0_4, %c0_5, %c0_6] : memref<1x8x32xf32, #tpu.memory_space<vmem>>, vector<1x8x32xf32>
    %6 = arith.mulf %0, %5 : vector<1x8x32xf32>
    %c0_7 = arith.constant 0 : index
    %c0_8 = arith.constant 0 : index
    %c0_9 = arith.constant 0 : index
    %7 = vector.load %arg4[%c0_7, %c0_8, %c0_9] : memref<1x8x32xf32, #tpu.memory_space<vmem>>, vector<1x8x32xf32>
    %8 = arith.mulf %4, %7 : vector<1x8x32xf32>
    %9 = arith.addf %6, %8 : vector<1x8x32xf32>
    %c0_10 = arith.constant 0 : index
    %c0_11 = arith.constant 0 : index
    %c0_12 = arith.constant 0 : index
    %10 = vector.load %arg6[%c0_10, %c0_11, %c0_12] : memref<1x8x32xf32, #tpu.memory_space<vmem>>, vector<1x8x32xf32>
    tpu.vector_store %arg6[%c0_10, %c0_11, %c0_12], %9 {strides = array<i32>} : memref<1x8x32xf32, #tpu.memory_space<vmem>>, vector<1x8x32xf32>,
    return
  }
  func.func @transform_0(%arg0: i32, %arg1: i32) -> (i32, i32, i32) {
    %c0_i32 = arith.constant 0 : i32
    %c0_i32_0 = arith.constant 0 : i32
    return %arg1, %arg0, %c0_i32 : i32, i32, i32
  }
  func.func @transform_1(%arg0: i32, %arg1: i32) -> (i32, i32, i32) {
    %c0_i32 = arith.constant 0 : i32
    %c0_i32_0 = arith.constant 0 : i32
    %c0_i32_1 = arith.constant 0 : i32
    return %c0_i32, %arg0, %c0_i32_0 : i32, i32, i32
  }
  func.func @transform_2(%arg0: i32, %arg1: i32) -> (i32, i32, i32) {
    %c0_i32 = arith.constant 0 : i32
    %c0_i32_0 = arith.constant 0 : i32
    %c0_i32_1 = arith.constant 0 : i32
    return %c0_i32, %arg0, %c0_i32_0 : i32, i32, i32
  }
  func.func @transform_3(%arg0: i32, %arg1: i32) -> (i32, i32) {
    %c0_i32 = arith.constant 0 : i32
    %c0_i32_0 = arith.constant 0 : i32
    %c0_i32_1 = arith.constant 0 : i32
    return %c0_i32, %c0_i32_0 : i32, i32
  }
  func.func @transform_4(%arg0: i32, %arg1: i32) -> (i32, i32, i32) {
    %c0_i32 = arith.constant 0 : i32
    %c0_i32_0 = arith.constant 0 : i32
    return %arg1, %arg0, %c0_i32 : i32, i32, i32
  }
}

</mosaic_0001>

<llo_original>
// kernel: tpu_custom_call.1
$region0: #{tpu_custom_call.1}
  #allocation0 [shape = 'u32[]', space=smem, size = 0x4, offset = 0x4, fixed_abs, tag = 'smem constant byte address 0x4 - core index']
  #allocation1 [shape = 'u32[72,128]{1,0:T(1,128)}', space=vmem, size = 0x9000, scoped, tag = 'internal scratch']
  %s0 = inlined_call_operand.hbm [shape: f32[2,8,32], index: 0, kind: input, shape index: {}]
  %s1 = inlined_call_operand.hbm [shape: f32[1,8,32], index: 1, kind: input, shape index: {}]
  %s2 = inlined_call_operand.hbm [shape: f32[1,8,32], index: 2, kind: input, shape index: {}]
  %s3 = inlined_call_operand.hbm [shape: f32[32,32], index: 3, kind: input, shape index: {}]
  %s4 = inlined_call_operand.hbm [shape: f32[2,8,32], index: 4, kind: output, shape index: {}]
  %s5 = sld [smem:[#allocation0]]
  $region65: #{tpu_custom_call.1} parent=0
    _
  %s7 = ssub.s32 1, %s5
  %s8 = scalar_select 0, %s7, %s5
  $region1: #{tpu_custom_call.1} parent=0
    #allocation2 [shape = 'u8[8192]{0}', space=vmem, size = 0x2000, scoped, tag = 'input window, operand 0']
    #allocation3 [shape = 's32[2]{0}', space=sflag, size = 0x8, scoped, tag = 'scoped memory for tpu_custom_call.1']
    #allocation4 [shape = 's32[2]{0}', space=sflag, size = 0x8, scoped, tag = 'scoped memory for tpu_custom_call.1']
    #allocation5 [shape = 'u8[4096]{0}', space=vmem, size = 0x1000, scoped, tag = 'input window, operand 1, single buffered']
    #allocation6 [shape = 's32[1]{0}', space=sflag, size = 0x4, scoped, tag = 'scoped memory for tpu_custom_call.1']
    #allocation7 [shape = 'u8[4096]{0}', space=vmem, size = 0x1000, scoped, tag = 'input window, operand 2, single buffered']
    #allocation8 [shape = 'u8[16384]{0}', space=vmem, size = 0x4000, scoped, tag = 'input window, operand 3, single buffered']
    #allocation9 [shape = 's32[1]{0}', space=sflag, size = 0x4, scoped, tag = 'scoped memory for tpu_custom_call.1']
    #allocation10 [shape = 'u8[8192]{0}', space=vmem, size = 0x2000, scoped, tag = 'output window, operand 0']
    %9 = vsyncpa [#allocation3], 0
    %s10 = scalar_lea.sflag [#allocation3], 1
    %11 = vsyncpa %s10, 0
    %12 = vsyncpa [#allocation6], 0
    %13 = vsyncpa [#allocation9], 0
    %14 = vsyncpa [#allocation4], 0
    %s15 = scalar_lea.sflag [#allocation4], 1
    %16 = vsyncpa %s15, 0
    loop: start=0, step=1, limit=4
    $region2: #{tpu_custom_call.1} parent=1 // loop_pre_header
      _
    $region3: #{tpu_custom_call.1} parent=1 // loop_header
      %s18 = sphi 0, %s22
      %p19 = scmp.ge.s32.totalorder %s18, 4
      %s25 = sphi 0, %s37
      %s26 = sphi 0, %s33
      %s27 = sphi 0, %s25
      %s28 = sphi 0, %s26
      %s29 = sphi 0, %s27
      %s30 = sphi 0, %s28
      %s42 = sphi 0, %s44
      %s45 = sphi 0, %s42
      %s46 = sphi 0, %s45
      %s62 = sphi 0, %s46
      %s68 = sphi 0, %s70
      %s71 = sphi 0, %s68
      %s72 = sphi 0, %s71
      %s88 = sphi 0, %s72
      %s94 = sphi 0, %s96
      %s97 = sphi 0, %s94
      %s98 = sphi 0, %s97
      %s114 = sphi 0, %s98
      %s118 = sphi 0, %s118
      %s120 = sphi 0, %s118
      %s121 = sphi 0, %s120
      %s135 = sphi 0, %s121
      %s143 = sphi 0, %s145
      %s146 = sphi 0, %s143
      %s147 = sphi 0, %s146
      %s163 = sphi 0, %s147
    $region4: #{tpu_custom_call.1} parent=1 // loop_header_branch
      %21 = sbr.rel (%p19) target = $region8
    $region5: #{tpu_custom_call.1} parent=1 // loop_body
      %s23 = ssub.s32 %s18, 1
      %s24 = ssub.s32 %s18, 2
      %s31 = sadd.s32 1, %s26
      %p32 = scmp.ge.s32.totalorder %s31, 2
      %s33 = scalar_select %p32, 0, %s31
      %s34 = sadd.s32 1, %s25
      %s35 = scalar_select %p32, %s34, %s25
      %p36 = scmp.ge.s32.totalorder %s35, 1
      %s37 = scalar_select %p36, 0, %s35
      %s38 = ssub.s32 %s26, %s33
      %s39 = ssub.s32 %s25, %s37
      %s40 = sor.u32 %s38, %s39
      %p41 = scmp.eq.s32.totalorder %s40, 0
      %s43 = sadd.s32 %s42, 1
      %s44 = scalar_select %p41, %s42, %s43
      %p47 = pneg %p41
      %p48 = scmp.eq.s32.totalorder %s18, 1
      %p49 = por %p47, %p48
      %p50 = scmp.ne.s32.totalorder %s42, %s45
      %p51 = scmp.eq.s32.totalorder %s18, 0
      %p52 = por %p50, %p51
      %p53 = scmp.ne.s32.totalorder %s42, %s45
      %p54 = scmp.eq.s32.totalorder %s23, 1
      %p55 = por %p53, %p54
      %p56 = scmp.ne.s32.totalorder %s45, %s46
      %p57 = scmp.eq.s32.totalorder %s23, 0
      %p58 = por %p56, %p57
      %p59 = scmp.ne.s32.totalorder %s45, %s46
      %p60 = scmp.eq.s32.totalorder %s24, 1
      %p61 = por %p59, %p60
      %p63 = scmp.ne.s32.totalorder %s46, %s62
      %p64 = scmp.eq.s32.totalorder %s24, 0
      %p65 = por %p63, %p64
      %s66 = ssub.s32 %s25, %s37
      %p67 = scmp.eq.s32.totalorder %s66, 0
      %s69 = sadd.s32 %s68, 1
      %s70 = scalar_select %p67, %s68, %s69
      %p73 = pneg %p67
      %p74 = scmp.eq.s32.totalorder %s18, 1
      %p75 = por %p73, %p74
      %p76 = scmp.ne.s32.totalorder %s68, %s71
      %p77 = scmp.eq.s32.totalorder %s18, 0
      %p78 = por %p76, %p77
      %p79 = scmp.ne.s32.totalorder %s68, %s71
      %p80 = scmp.eq.s32.totalorder %s23, 1
      %p81 = por %p79, %p80
      %p82 = scmp.ne.s32.totalorder %s71, %s72
      %p83 = scmp.eq.s32.totalorder %s23, 0
      %p84 = por %p82, %p83
      %p85 = scmp.ne.s32.totalorder %s71, %s72
      %p86 = scmp.eq.s32.totalorder %s24, 1
      %p87 = por %p85, %p86
      %p89 = scmp.ne.s32.totalorder %s72, %s88
      %p90 = scmp.eq.s32.totalorder %s24, 0
      %p91 = por %p89, %p90
      %s92 = ssub.s32 %s25, %s37
      %p93 = scmp.eq.s32.totalorder %s92, 0
      %s95 = sadd.s32 %s94, 1
      %s96 = scalar_select %p93, %s94, %s95
      %p99 = pneg %p93
      %p100 = scmp.eq.s32.totalorder %s18, 1
      %p101 = por %p99, %p100
      %p102 = scmp.ne.s32.totalorder %s94, %s97
      %p103 = scmp.eq.s32.totalorder %s18, 0
      %p104 = por %p102, %p103
      %p105 = scmp.ne.s32.totalorder %s94, %s97
      %p106 = scmp.eq.s32.totalorder %s23, 1
      %p107 = por %p105, %p106
      %p108 = scmp.ne.s32.totalorder %s97, %s98
      %p109 = scmp.eq.s32.totalorder %s23, 0
      %p110 = por %p108, %p109
      %p111 = scmp.ne.s32.totalorder %s97, %s98
      %p112 = scmp.eq.s32.totalorder %s24, 1
      %p113 = por %p111, %p112
      %p115 = scmp.ne.s32.totalorder %s98, %s114
      %p116 = scmp.eq.s32.totalorder %s24, 0
      %p117 = por %p115, %p116
      %s119 = sadd.s32 %s118, 1
      %p122 = scmp.eq.s32.totalorder %s18, 1
      %p123 = scmp.ne.s32.totalorder %s118, %s120
      %p124 = scmp.eq.s32.totalorder %s18, 0
      %p125 = por %p123, %p124
      %p126 = scmp.ne.s32.totalorder %s118, %s120
      %p127 = scmp.eq.s32.totalorder %s23, 1
      %p128 = por %p126, %p127
      %p129 = scmp.ne.s32.totalorder %s120, %s121
      %p130 = scmp.eq.s32.totalorder %s23, 0
      %p131 = por %p129, %p130
      %p132 = scmp.ne.s32.totalorder %s120, %s121
      %p133 = scmp.eq.s32.totalorder %s24, 1
      %p134 = por %p132, %p133
      %p136 = scmp.ne.s32.totalorder %s121, %s135
      %p137 = scmp.eq.s32.totalorder %s24, 0
      %p138 = por %p136, %p137
      %s139 = ssub.s32 %s26, %s33
      %s140 = ssub.s32 %s25, %s37
      %s141 = sor.u32 %s139, %s140
      %p142 = scmp.eq.s32.totalorder %s141, 0
      %s144 = sadd.s32 %s143, 1
      %s145 = scalar_select %p142, %s143, %s144
      %p148 = pneg %p142
      %p149 = scmp.eq.s32.totalorder %s18, 1
      %p150 = por %p148, %p149
      %p151 = scmp.ne.s32.totalorder %s143, %s146
      %p152 = scmp.eq.s32.totalorder %s18, 0
      %p153 = por %p151, %p152
      %p154 = scmp.ne.s32.totalorder %s143, %s146
      %p155 = scmp.eq.s32.totalorder %s23, 1
      %p156 = por %p154, %p155
      %p157 = scmp.ne.s32.totalorder %s146, %s147
      %p158 = scmp.eq.s32.totalorder %s23, 0
      %p159 = por %p157, %p158
      %p160 = scmp.ne.s32.totalorder %s146, %s147
      %p161 = scmp.eq.s32.totalorder %s24, 1
      %p162 = por %p160, %p161
      %p164 = scmp.ne.s32.totalorder %s147, %s163
      %p165 = scmp.eq.s32.totalorder %s24, 0
      %p166 = por %p164, %p165
      %p167 = scmp.le.s32.totalorder 1, %s18
      %p168 = scmp.lt.s32.totalorder %s18, 3
      %p169 = pnand %p167, %p168
      %p170 = pneg %p169
      // Predicated region
      $region9: #{tpu_custom_call.1} parent=5 // pred_check
        _
      $region10: #{tpu_custom_call.1} parent=5 // pred_check_branch
        %172 = sbr.rel (%p169) target = $region12
      $region11: #{tpu_custom_call.1} parent=5 // pred_region
        %s173 = ssub.s32 %s18, 1
        // Predicated region
        $region13: #{tpu_custom_call.1} parent=11 // pred_check
          %p174 = pneg %p84
        $region14: #{tpu_custom_call.1} parent=11 // pred_check_branch
          %176 = sbr.rel (%p174) target = $region16
        $region15: #{tpu_custom_call.1} parent=11 // pred_region
          %178 = vsyncadd [#allocation6], 0
          %s179 = smul.addr %s27, 8
          %s180 = scalar_lea.hbm %s1, %s179
          %s182 = sshll.u32 %s180, 4
          %s183 = int_to_ptr.hbm [resolvable:$true] %s182
          %s184 = sshll.u32 [#allocation5], 4
          %s185 = int_to_ptr.vmem [resolvable:$true] %s184
          %187 = dma.hbm_to_vmem [thread:$0]  %s183, 128, %s185, [#allocation6]
        $region16: #{tpu_custom_call.1} parent=11 // pred_fallthru
          _
        // Predicated region
        $region17: #{tpu_custom_call.1} parent=11 // pred_check
          %p188 = pneg %p110
        $region18: #{tpu_custom_call.1} parent=11 // pred_check_branch
          %190 = sbr.rel (%p188) target = $region20
        $region19: #{tpu_custom_call.1} parent=11 // pred_region
          %192 = vsyncadd [#allocation6], 0
          %s193 = smul.addr %s27, 8
          %s194 = scalar_lea.hbm %s2, %s193
          %s196 = sshll.u32 %s194, 4
          %s197 = int_to_ptr.hbm [resolvable:$true] %s196
          %s198 = sshll.u32 [#allocation7], 4
          %s199 = int_to_ptr.vmem [resolvable:$true] %s198
          %201 = dma.hbm_to_vmem [thread:$0]  %s197, 128, %s199, [#allocation6]
        $region20: #{tpu_custom_call.1} parent=11 // pred_fallthru
          _
        // Predicated region
        $region21: #{tpu_custom_call.1} parent=11 // pred_check
          %p202 = pneg %p131
        $region22: #{tpu_custom_call.1} parent=11 // pred_check_branch
          %204 = sbr.rel (%p202) target = $region24
        $region23: #{tpu_custom_call.1} parent=11 // pred_region
          %206 = vsyncadd [#allocation9], 0
          %s207 = sshll.u32 %s3, 4
          %s208 = int_to_ptr.hbm [resolvable:$true] %s207
          %s209 = sshll.u32 [#allocation8], 4
          %s210 = int_to_ptr.vmem [resolvable:$true] %s209
          %215 = dma.hbm_to_vmem [thread:$0]  %s208, 512, %s210, [#allocation9], 128, 128, 8
        $region24: #{tpu_custom_call.1} parent=11 // pred_fallthru
          _
      $region12: #{tpu_custom_call.1} parent=5 // pred_fallthru
        _
      %p216 = scmp.lt.s32.totalorder %s18, 2
      // Predicated region
      $region25: #{tpu_custom_call.1} parent=5 // pred_check
        %p217 = pneg %p216
      $region26: #{tpu_custom_call.1} parent=5 // pred_check_branch
        %219 = sbr.rel (%p217) target = $region28
      $region27: #{tpu_custom_call.1} parent=5 // pred_region
        // Predicated region
        $region29: #{tpu_custom_call.1} parent=27 // pred_check
          %p220 = pneg %p52
        $region30: #{tpu_custom_call.1} parent=27 // pred_check_branch
          %222 = sbr.rel (%p220) target = $region32
        $region31: #{tpu_custom_call.1} parent=27 // pred_region
          %s223 = sand.u32 %s42, 1
          %s224 = scalar_lea.sflag [#allocation3], %s223
          %s225 = sand.u32 %s42, 1
          %s226 = smul.addr %s225, 8
          %s227 = scalar_lea.vmem [#allocation2], %s226
          %229 = vsyncadd %s224, 0
          %s230 = sadd.s32 %s25, %s26
          %s231 = smul.addr %s230, 8
          %s232 = scalar_lea.hbm %s0, %s231
          %s234 = sshll.u32 %s232, 4
          %s235 = int_to_ptr.hbm [resolvable:$true] %s234
          %s236 = sshll.u32 %s227, 4
          %s237 = int_to_ptr.vmem [resolvable:$true] %s236
          %239 = dma.hbm_to_vmem [thread:$0]  %s235, 128, %s237, %s224
        $region32: #{tpu_custom_call.1} parent=27 // pred_fallthru
          _
      $region28: #{tpu_custom_call.1} parent=5 // pred_fallthru
        _
      %p240 = scmp.le.s32.totalorder 1, %s18
      %p241 = scmp.lt.s32.totalorder %s18, 3
      %p242 = pnand %p240, %p241
      %p243 = pneg %p242
      // Predicated region
      $region33: #{tpu_custom_call.1} parent=5 // pred_check
        _
      $region34: #{tpu_custom_call.1} parent=5 // pred_check_branch
        %245 = sbr.rel (%p242) target = $region36
      $region35: #{tpu_custom_call.1} parent=5 // pred_region
        %s246 = ssub.s32 %s18, 1
        %s247 = sand.u32 %s45, 1
        %s248 = scalar_lea.sflag [#allocation3], %s247
        %s249 = sand.u32 %s45, 1
        %s250 = smul.addr %s249, 8
        %s251 = scalar_lea.vmem [#allocation2], %s250
        // Predicated region
        $region37: #{tpu_custom_call.1} parent=35 // pred_check
          %p252 = pneg %p58
        $region38: #{tpu_custom_call.1} parent=35 // pred_check_branch
          %254 = sbr.rel (%p252) target = $region40
        $region39: #{tpu_custom_call.1} parent=35 // pred_region
          %256 = dma.done %s248, 128
        $region40: #{tpu_custom_call.1} parent=35 // pred_fallthru
          _
        // Predicated region
        $region41: #{tpu_custom_call.1} parent=35 // pred_check
          %p257 = pneg %p84
        $region42: #{tpu_custom_call.1} parent=35 // pred_check_branch
          %259 = sbr.rel (%p257) target = $region44
        $region43: #{tpu_custom_call.1} parent=35 // pred_region
          %261 = dma.done [#allocation6], 128
        $region44: #{tpu_custom_call.1} parent=35 // pred_fallthru
          _
        // Predicated region
        $region45: #{tpu_custom_call.1} parent=35 // pred_check
          %p262 = pneg %p110
        $region46: #{tpu_custom_call.1} parent=35 // pred_check_branch
          %264 = sbr.rel (%p262) target = $region48
        $region47: #{tpu_custom_call.1} parent=35 // pred_region
          %266 = dma.done [#allocation6], 128
        $region48: #{tpu_custom_call.1} parent=35 // pred_fallthru
          _
        // Predicated region
        $region49: #{tpu_custom_call.1} parent=35 // pred_check
          %p267 = pneg %p131
        $region50: #{tpu_custom_call.1} parent=35 // pred_check_branch
          %269 = sbr.rel (%p267) target = $region52
        $region51: #{tpu_custom_call.1} parent=35 // pred_region
          %271 = dma.done [#allocation9], 512
        $region52: #{tpu_custom_call.1} parent=35 // pred_fallthru
          _
        %s272 = sand.u32 %s45, 1
        %s273 = scalar_lea.sflag [#allocation3], %s272
        %s274 = sand.u32 %s45, 1
        %s275 = smul.addr %s274, 8
        %s276 = scalar_lea.vmem [#allocation2], %s275
        %p277 = pneg %p58
        %p278 = pneg %p55
        %p279 = pneg %p84
        %p280 = pneg %p81
        %p281 = pneg %p110
        %p282 = pneg %p107
        %p283 = pneg %p131
        %p284 = pneg %p128
        %p285 = pneg %p159
        %p286 = pneg %p156
        %s287 = sand.u32 %s146, 1
        %s288 = scalar_lea.sflag [#allocation4], %s287
        %s289 = sand.u32 %s146, 1
        %s290 = smul.addr %s289, 8
        %s291 = scalar_lea.vmem [#allocation10], %s290
        %v292 = vld [vmem:[%s251] sm:$0xff]
        %v293 = vld [vmem:[#allocation8] sm:$0xff]
        %v294 = vld [vmem:[#allocation8 + $0x8] sm:$0xff]
        %v295 = vld [vmem:[#allocation8 + $0x10] sm:$0xff]
        %v296 = vld [vmem:[#allocation8 + $0x18] sm:$0xff]
        %vm297 = vcmask 261120
        %v299 = vsel %vm297, %v292, 0
        %301 = vmatpush.msra.mxu0 0.0
        %302 = vmatpush.msra.mxu0 0.0
        %303 = vmatpush.msra.mxu0 0.0
        %304 = vmatpush.msra.mxu0 0.0
        %305 = vmatpush.msra.mxu0 0.0
        %306 = vmatpush.msra.mxu0 0.0
        %307 = vmatpush.msra.mxu0 0.0
        %308 = vmatpush.msra.mxu0 0.0
        %309 = vmatpush.msra.mxu0 0.0
        %310 = vmatpush.msra.mxu0 0.0
        %311 = vmatpush.msra.mxu0 0.0
        %312 = vmatpush.msra.mxu0 0.0
        %313 = vmatpush.msra.mxu0 %v296
        %314 = vmatpush.msra.mxu0 %v295
        %315 = vmatpush.msra.mxu0 %v294
        %316 = vmatpush.msra.mxu0 %v293
        %317 = vmatmul.f32.gmra.mxu0 %v299
        %v318 = vpop.f32.mrf.mxu0
        %v319 = vadd.f32 0.0, %v318
        %320 = vdwg.mxu0
        %v321 = vld [vmem:[#allocation5] sm:$0xff]
        %v322 = vmul.f32 %v292, %v321
        %v323 = vld [vmem:[#allocation7] sm:$0xff]
        %v324 = vmul.f32 %v319, %v323
        %v325 = vadd.f32 %v322, %v324
        %326 = vst.msk [vmem:[%s291] sm:$0xff] %vm297, %v325
        %s327 = sand.u32 %s146, 1
        %s328 = scalar_lea.sflag [#allocation4], %s327
        %s329 = sand.u32 %s146, 1
        %s330 = smul.addr %s329, 8
        %s331 = scalar_lea.vmem [#allocation10], %s330
        // Predicated region
        $region53: #{tpu_custom_call.1} parent=35 // pred_check
          %p332 = pneg %p156
        $region54: #{tpu_custom_call.1} parent=35 // pred_check_branch
          %334 = sbr.rel (%p332) target = $region56
        $region55: #{tpu_custom_call.1} parent=35 // pred_region
          %336 = vsyncadd %s328, 0
          %s337 = sadd.s32 %s27, %s28
          %s338 = smul.addr %s337, 8
          %s339 = scalar_lea.hbm %s4, %s338
          %s341 = sshll.u32 %s331, 4
          %s342 = int_to_ptr.vmem [resolvable:$true] %s341
          %s343 = sshll.u32 %s339, 4
          %s344 = int_to_ptr.hbm [resolvable:$true] %s343
          %346 = dma.vmem_to_hbm [thread:$0]  %s342, 128, %s344, %s328
        $region56: #{tpu_custom_call.1} parent=35 // pred_fallthru
          _
      $region36: #{tpu_custom_call.1} parent=5 // pred_fallthru
        _
      %p347 = scmp.le.s32.totalorder 2, %s18
      // Predicated region
      $region57: #{tpu_custom_call.1} parent=5 // pred_check
        %p348 = pneg %p347
      $region58: #{tpu_custom_call.1} parent=5 // pred_check_branch
        %350 = sbr.rel (%p348) target = $region60
      $region59: #{tpu_custom_call.1} parent=5 // pred_region
        %s351 = ssub.s32 %s18, 2
        // Predicated region
        $region61: #{tpu_custom_call.1} parent=59 // pred_check
          %p352 = pneg %p162
        $region62: #{tpu_custom_call.1} parent=59 // pred_check_branch
          %354 = sbr.rel (%p352) target = $region64
        $region63: #{tpu_custom_call.1} parent=59 // pred_region
          %s355 = sand.u32 %s147, 1
          %s356 = scalar_lea.sflag [#allocation4], %s355
          %s357 = sand.u32 %s147, 1
          %s358 = smul.addr %s357, 8
          %s359 = scalar_lea.vmem [#allocation10], %s358
          %361 = dma.done %s356, 128
        $region64: #{tpu_custom_call.1} parent=59 // pred_fallthru
          _
      $region60: #{tpu_custom_call.1} parent=5 // pred_fallthru
        _
    $region6: #{tpu_custom_call.1} parent=1 // loop_footer
      %s22 = sadd.s32 1, %s18
    $region7: #{tpu_custom_call.1} parent=1 // loop_footer_branch
      %17 = sbr.rel target = $region3
    $region8: #{tpu_custom_call.1} parent=1 // loop_exit
      _
    %362 = vsyncpa [#allocation3], 1
    %s363 = scalar_lea.sflag [#allocation3], 1
    %364 = vsyncpa %s363, 1
    %365 = vsyncpa [#allocation6], 1
    %366 = vsyncpa [#allocation9], 1
    %367 = vsyncpa [#allocation4], 1
    %s368 = scalar_lea.sflag [#allocation4], 1
    %369 = vsyncpa %s368, 1

</llo_original>
